<compile_context>
chip_gen: v7x
topology: tpu7x:2x2x1
jax: 0.10.0
libtpu: 0.0.40
codegen_flags: <defaults>
</compile_context>

<pallas_src>
import jax
import jax.numpy as jnp
from jax.experimental import pallas as pl
from jax.experimental.pallas import tpu as pltpu

# The fixed prediction from the first train sample (30 values).
_PREDICTION = jnp.array(
    [[0.4685, -0.2319, -0.4253, -0.1953, 0.2908, -0.2214, 0.5992, -0.2214,
      -0.2685, -0.2109, -0.5873, -0.19, 0.1967, -0.3827, 0.7656, -0.4295,
      -0.2035, -0.3758, -0.7389, -0.3573, 0.0086, 0.2333, 0.4163, 0.662,
      -0.3521, 0.6985, 0.0138, 0.6045, 0.019, 0.9076]],
    dtype=jnp.float32,
)  # shape (1, 30)

# Max rows per output block when tiling very large batches.
# 2048 * 30 * 4 B ~= 240 KiB per block (x2 double-buffer) -> trivial VMEM
# footprint on every generation (incl. v7x's 64 MiB).
_TILE_B_MAX = 2048


def _broadcast_kernel(pred_ref, out_ref):
    # pred_ref: (1, 30) constant row, fetched once per grid step (1 step for
    #           small N); out_ref: (TILE_B, 30) output block.
    # Pure streamed store: no extra VPU work competing with the store slot.
    out_ref[...] = jnp.broadcast_to(pred_ref[...], out_ref.shape)


def dummy_keypoint_forward(x: jax.Array, prediction: jax.Array = _PREDICTION) -> jax.Array:
    """Equivalent of DummyKeypointModel.forward.

    x: (N, C, H, W) — only the batch size N is used.
    Returns: (N, 1, 1, 30) float32.
    """
    n = x.shape[0]
    pred2 = prediction.reshape(1, 30).astype(jnp.float32)

    # Pick the batch tile:
    #  * small or "awkward" N -> single full-array block (block dims equal the
    #    full array dims, which satisfies the (8, 128) rule for the last dim 30).
    #  * large N divisible by 8 -> a multiple-of-8 divisor of N capped at
    #    _TILE_B_MAX, so each block is a few hundred KiB and double-buffering
    #    hides the HBM writeback.
    tile_b = n
    if n > _TILE_B_MAX and n % 8 == 0:
        tile_b = _TILE_B_MAX
        while n % tile_b != 0:
            tile_b -= 8  # terminates (n % 8 == 0), stays a multiple of 8

    grid = (n // tile_b,)

    out2d = pl.pallas_call(
        _broadcast_kernel,
        out_shape=jax.ShapeDtypeStruct((n, 30), jnp.float32),
        grid_spec=pl.GridSpec(
            grid=grid,
            in_specs=[
                # Same tiny constant tile for every grid step.
                pl.BlockSpec((1, 30), lambda b: (0, 0)),
            ],
            out_specs=pl.BlockSpec((tile_b, 30), lambda b: (b, 0)),
        ),
        compiler_params=pltpu.CompilerParams(
            dimension_semantics=("parallel",),
        ),
    )(pred2)

    # Free metadata reshape back to the PyTorch output layout (N, 1, 1, 30).
    return out2d.reshape(n, 1, 1, 30)


if __name__ == "__main__":
    key = jax.random.PRNGKey(0)
    # Small NCHW batch consistent with the module (only batch size matters).
    x = jax.random.normal(key, (2, 4, 16, 16), dtype=jnp.float32)

    out = dummy_keypoint_forward(x)
    out = jax.block_until_ready(out)

    # Correctness check against the reference semantics.
    expected = jnp.broadcast_to(
        _PREDICTION.reshape(1, 1, 1, 30), (x.shape[0], 1, 1, 30)
    )
    assert out.shape == (2, 1, 1, 30), out.shape
    assert out.dtype == jnp.float32, out.dtype
    assert bool(jnp.allclose(out, expected)), "output mismatch vs reference"

    print("KERNEL_OK")
</pallas_src>

<mosaic_0001>
module attributes {stable_mosaic.version = 11 : i64} {
  func.func @_broadcast_kernel(%arg0: i32, %arg1: memref<1x30xf32, #tpu.memory_space<vmem>>, %arg2: memref<2x30xf32, #tpu.memory_space<vmem>>) attributes {dimension_semantics = [#tpu.dimension_semantics<parallel>], iteration_bounds = array<i64: 1>, scalar_prefetch = 0 : i64, scratch_operands = 0 : i64, tpu.core_type = #tpu.core_type<tc>, window_params = [{pipeline_mode = #tpu.pipeline_mode<synchronous>, transform_indices = @transform_0, window_bounds = array<i64: 1, 30>}, {transform_indices = @transform_1, window_bounds = array<i64: 2, 30>}]} {
    %c0 = arith.constant 0 : index
    %c0_0 = arith.constant 0 : index
    %0 = vector.load %arg1[%c0, %c0_0] : memref<1x30xf32, #tpu.memory_space<vmem>>, vector<1x30xf32>
    %1 = vector.shape_cast %0 : vector<1x30xf32> to vector<1x30xf32>
    %2 = vector.broadcast %1 : vector<1x30xf32> to vector<2x30xf32>
    %c0_1 = arith.constant 0 : index
    %c0_2 = arith.constant 0 : index
    %3 = vector.load %arg2[%c0_1, %c0_2] : memref<2x30xf32, #tpu.memory_space<vmem>>, vector<2x30xf32>
    tpu.vector_store %arg2[%c0_1, %c0_2], %2 {strides = array<i32>} : memref<2x30xf32, #tpu.memory_space<vmem>>, vector<2x30xf32>,
    return
  }
  func.func @transform_0(%arg0: i32) -> (i32, i32) {
    %c0_i32 = arith.constant 0 : i32
    %c0_i32_0 = arith.constant 0 : i32
    %c0_i32_1 = arith.constant 0 : i32
    return %c0_i32, %c0_i32_0 : i32, i32
  }
  func.func @transform_1(%arg0: i32) -> (i32, i32) {
    %c0_i32 = arith.constant 0 : i32
    %c0_i32_0 = arith.constant 0 : i32
    return %arg0, %c0_i32 : i32, i32
  }
}

</mosaic_0001>

<llo_original>
// kernel: tpu_custom_call.1
$region0: #{tpu_custom_call.1}
  #allocation0 [shape = 'u32[]', space=smem, size = 0x4, offset = 0x4, fixed_abs, tag = 'smem constant byte address 0x4 - core index']
  #allocation1 [shape = 'u32[144,128]{1,0:T(1,128)}', space=vmem, size = 0x12000, scoped, tag = 'internal scratch']
  %s0 = inlined_call_operand.hbm [shape: f32[1,30], index: 0, kind: input, shape index: {}]
  %s1 = inlined_call_operand.hbm [shape: f32[2,30], index: 1, kind: output, shape index: {}]
  %s2 = sld [smem:[#allocation0]]
  $region18: #{tpu_custom_call.1} parent=0
    _
  %s4 = ssub.s32 1, %s2
  %s5 = scalar_select 0, %s4, %s2
  $region1: #{tpu_custom_call.1} parent=0
    #allocation2 [shape = 'u8[512]{0}', space=vmem, size = 0x400, scoped, tag = 'input window, operand 0, single buffered']
    #allocation3 [shape = 's32[1]{0}', space=sflag, size = 0x4, scoped, tag = 'scoped memory for tpu_custom_call.1']
    #allocation4 [shape = 's32[1]{0}', space=sflag, size = 0x4, scoped, tag = 'scoped memory for tpu_custom_call.1']
    #allocation5 [shape = 'u8[1024]{0}', space=vmem, size = 0x400, scoped, tag = 'output window, operand 0, single buffered']
    %6 = vsyncpa [#allocation3], 0
    %7 = vsyncpa [#allocation4], 0
    // Predicated region
    $region2: #{tpu_custom_call.1} parent=1 // pred_check
      _
    $region3: #{tpu_custom_call.1} parent=1 // pred_check_branch
      %9 = sbr.rel (0) target = $region5
    $region4: #{tpu_custom_call.1} parent=1 // pred_region
      %s11 = ssub.s32 16, 16
      %12 = vsyncadd [#allocation3], %s11
      %s14 = sshll.u32 [#allocation2], 4
      %s15 = int_to_ptr.vmem [resolvable:$true] %s14
      %17 = dma.hbm_to_vmem [thread:$0]  %s0, 16, %s15, [#allocation3]
    $region5: #{tpu_custom_call.1} parent=1 // pred_fallthru
      _
    // Predicated region
    $region6: #{tpu_custom_call.1} parent=1 // pred_check
      _
    $region7: #{tpu_custom_call.1} parent=1 // pred_check_branch
      %19 = sbr.rel (0) target = $region9
    $region8: #{tpu_custom_call.1} parent=1 // pred_region
      %20 = dma.done [#allocation3], 16
    $region9: #{tpu_custom_call.1} parent=1 // pred_fallthru
      _
    %v21 = vld [vmem:[#allocation2] sm:$0x1]
    %v23 = vlaneseq
    %v24 = vshrl.u32 %v23, 7
    %v25 = vsub.s32 0, %v24
    %v26 = vrot.slane %v21, %v25
    %vm28 = vcmask 238592
    %29 = vst.msk [vmem:[#allocation5] sm:$0x3] %vm28, %v26
    // Predicated region
    $region10: #{tpu_custom_call.1} parent=1 // pred_check
      _
    $region11: #{tpu_custom_call.1} parent=1 // pred_check_branch
      %31 = sbr.rel (0) target = $region13
    $region12: #{tpu_custom_call.1} parent=1 // pred_region
      %s33 = ssub.s32 32, 32
      %34 = vsyncadd [#allocation4], %s33
      %s36 = sshll.u32 [#allocation5], 4
      %s37 = int_to_ptr.vmem [resolvable:$true] %s36
      %39 = dma.vmem_to_hbm [thread:$0]  %s37, 32, %s1, [#allocation4]
    $region13: #{tpu_custom_call.1} parent=1 // pred_fallthru
      _
    // Predicated region
    $region14: #{tpu_custom_call.1} parent=1 // pred_check
      _
    $region15: #{tpu_custom_call.1} parent=1 // pred_check_branch
      %41 = sbr.rel (0) target = $region17
    $region16: #{tpu_custom_call.1} parent=1 // pred_region
      %42 = dma.done [#allocation4], 32
    $region17: #{tpu_custom_call.1} parent=1 // pred_fallthru
      _
    %43 = vsyncpa [#allocation3], 1
    %44 = vsyncpa [#allocation4], 1

</llo_original>
